<compile_context>
chip_gen: v7x
topology: tpu7x:2x2x1
jax: 0.10.0
libtpu: 0.0.40
codegen_flags: <defaults>
</compile_context>

<pallas_src>
import functools
import math

import jax
import jax.numpy as jnp
from jax.experimental import pallas as pl
from jax.experimental.pallas import tpu as pltpu

_SQRT_2_OVER_PI = math.sqrt(2.0 / math.pi)


def _gelu_tanh(h):
    # GELU (tanh approximation) in f32: tanh -> EUP slot, polynomial -> VPU; both
    # hide under MXU cycles once the token tile is large.
    return 0.5 * h * (1.0 + jnp.tanh(_SQRT_2_OVER_PI * (h + 0.044715 * (h * h * h))))


# ------------------------------ kernels ------------------------------

def _mlp_kernel_resident(x_ref, w1_ref, b1_ref, w2_ref, b2_ref, o_ref):
    # x_ref:  (tm, C) token tile (f32 or bf16)
    # w1_ref: (C, H)  c_fc weight, [in, out] layout (resident in VMEM)
    # b1_ref: (1, H)  c_fc bias (f32)
    # w2_ref: (H, C)  c_proj weight, [in, out] layout (resident in VMEM)
    # b2_ref: (1, C)  c_proj bias (f32)
    x = x_ref[...]
    h = jnp.dot(x, w1_ref[...], preferred_element_type=jnp.float32) + b1_ref[...]
    h = _gelu_tanh(h)
    out = jnp.dot(h.astype(w2_ref.dtype), w2_ref[...],
                  preferred_element_type=jnp.float32) + b2_ref[...]
    o_ref[...] = out.astype(o_ref.dtype)


def _mlp_kernel_htiled(x_ref, w1_ref, b1_ref, w2_ref, b2_ref, o_ref, acc_ref):
    # Trailing "arbitrary" grid axis over H. Per step:
    #   x_ref (tm, C), w1_ref (C, tH), b1_ref (1, tH), w2_ref (tH, C), b2_ref (1, C)
    # GELU is elementwise in H, so each H-tile's contribution is independent and the
    # c_proj partial products accumulate into the f32 scratch.
    j = pl.program_id(1)

    @pl.when(j == 0)
    def _():
        acc_ref[...] = jnp.zeros_like(acc_ref)

    x = x_ref[...]
    h = jnp.dot(x, w1_ref[...], preferred_element_type=jnp.float32) + b1_ref[...]
    h = _gelu_tanh(h)
    acc_ref[...] += jnp.dot(h.astype(w2_ref.dtype), w2_ref[...],
                            preferred_element_type=jnp.float32)

    @pl.when(j == pl.num_programs(1) - 1)
    def _():
        o_ref[...] = (acc_ref[...] + b2_ref[...]).astype(o_ref.dtype)


# --------------------------- build helpers ---------------------------

@functools.lru_cache(maxsize=None)
def _vmem_limit_bytes():
    """Scoped VMEM limit: physical capacity minus ~15% headroom for Mosaic's
    internal scratch/semaphores, capped at 112 MiB.  ~54 MiB on v7x (64 MiB/TC),
    ~108 MiB on v5e/v6e (128 MiB)."""
    physical = 64 * 1024 * 1024  # conservative default (v7x-sized) if query fails
    try:
        physical = int(pltpu.get_tpu_info().vmem_capacity_bytes)
    except Exception:  # hardware query only; never wraps the real kernel
        pass
    return min(int(physical * 0.85), 112 * 1024 * 1024)


@functools.lru_cache(maxsize=None)
def _single_buffered_weights_supported():
    """Narrow, cached, one-time probe: can this jax/Mosaic single-buffer a
    constant-index_map input via pipeline_mode=pl.Buffered(1)?  Only this tiny
    probe kernel is guarded -- the real MLP call is never wrapped in a try."""
    if not hasattr(pl, "Buffered"):
        return False

    def _copy(x_ref, o_ref):
        o_ref[...] = x_ref[...]

    try:
        spec = pl.BlockSpec((8, 128), lambda i: (0, 0), pipeline_mode=pl.Buffered(1))
        fn = pl.pallas_call(
            _copy,
            out_shape=jax.ShapeDtypeStruct((8, 128), jnp.float32),
            grid=(1,),
            in_specs=[spec],
            out_specs=pl.BlockSpec((8, 128), lambda i: (0, 0)),
        )
        jax.block_until_ready(fn(jnp.zeros((8, 128), jnp.float32)))
        return True
    except Exception:
        return False


def _cost_estimate(M, C, H, x_bytes, w_bytes, out_bytes):
    return pl.CostEstimate(
        flops=4 * M * C * H,                 # two (M,C)x(C,H) / (M,H)x(H,C) matmuls
        transcendentals=M * H,               # tanh in GELU
        bytes_accessed=M * C * (x_bytes + out_bytes) + 2 * C * H * w_bytes + (H + C) * 4,
    )


def _build_resident_call(grid_m, tm, C, H, out_dtype, vmem_limit, cost):
    resident_kwargs = (dict(pipeline_mode=pl.Buffered(1))
                       if _single_buffered_weights_supported() else {})
    in_specs = [
        pl.BlockSpec((tm, C), lambda i: (i, 0)),                     # x (streamed)
        pl.BlockSpec((C, H), lambda i: (0, 0), **resident_kwargs),   # W1 (resident)
        pl.BlockSpec((1, H), lambda i: (0, 0), **resident_kwargs),   # b1 (resident)
        pl.BlockSpec((H, C), lambda i: (0, 0), **resident_kwargs),   # W2 (resident)
        pl.BlockSpec((1, C), lambda i: (0, 0), **resident_kwargs),   # b2 (resident)
    ]
    return pl.pallas_call(
        _mlp_kernel_resident,
        out_shape=jax.ShapeDtypeStruct((grid_m * tm, C), out_dtype),
        grid_spec=pltpu.PrefetchScalarGridSpec(
            num_scalar_prefetch=0,
            grid=(grid_m,),
            in_specs=in_specs,
            out_specs=pl.BlockSpec((tm, C), lambda i: (i, 0)),
        ),
        compiler_params=pltpu.CompilerParams(
            dimension_semantics=("parallel",),   # token axis: megacore / 2x TC on v7x
            vmem_limit_bytes=vmem_limit,
        ),
        cost_estimate=cost,
    )


def _build_htiled_call(grid_m, tm, grid_h, th, C, H, out_dtype, vmem_limit, cost):
    in_specs = [
        pl.BlockSpec((tm, C), lambda i, j: (i, 0)),    # x (resident across H steps)
        pl.BlockSpec((C, th), lambda i, j: (0, j)),    # W1 column tile (streamed)
        pl.BlockSpec((1, th), lambda i, j: (0, j)),    # b1 tile
        pl.BlockSpec((th, C), lambda i, j: (j, 0)),    # W2 row tile (streamed)
        pl.BlockSpec((1, C), lambda i, j: (0, 0)),     # b2 (resident)
    ]
    return pl.pallas_call(
        _mlp_kernel_htiled,
        out_shape=jax.ShapeDtypeStruct((grid_m * tm, C), out_dtype),
        grid_spec=pltpu.PrefetchScalarGridSpec(
            num_scalar_prefetch=0,
            grid=(grid_m, grid_h),
            in_specs=in_specs,
            out_specs=pl.BlockSpec((tm, C), lambda i, j: (i, 0)),
            scratch_shapes=[pltpu.VMEM((tm, C), jnp.float32)],
        ),
        compiler_params=pltpu.CompilerParams(
            dimension_semantics=("parallel", "arbitrary"),
            vmem_limit_bytes=vmem_limit,
        ),
        cost_estimate=cost,
    )


# ------------------------------ wrapper ------------------------------

def prepare_mlp_params(w1, b1, w2, b2, *, use_bf16_matmul=True):
    """Cast/shape the MLP parameters ONCE (hoisted out of the per-call wrapper so
    repeated layer calls don't pay a W1+W2 HBM round-trip for the converts).

    w1: (C, 4C) c_fc weight in [in, out] layout (== torch weight.T);  b1: (4C,)
    w2: (4C, C) c_proj weight in [in, out] layout;                    b2: (C,)

    use_bf16_matmul=True is the production default (full MXU rate, f32 accumulation);
    the f32 matmul path is kept for debugging / tight-tolerance checks.
    """
    wdt = jnp.bfloat16 if use_bf16_matmul else jnp.float32
    C, H = w1.shape
    return dict(
        w1=jnp.asarray(w1, wdt),
        w2=jnp.asarray(w2, wdt),
        b1=jnp.asarray(b1, jnp.float32).reshape(1, H),
        b2=jnp.asarray(b2, jnp.float32).reshape(1, C),
        use_bf16_matmul=use_bf16_matmul,
    )


def mlp_pallas(x, params, *, tm=512, tile_h=None, force_h_tiled=False):
    """GPT-2 MLP forward: GELU_tanh(x @ W1 + b1) @ W2 + b2.

    x: (B, T, C); `params` from prepare_mlp_params (weights already in matmul dtype).

    NOTE: for decode-sized M = B*T < ~128 the token tile collapses to a few
    sublanes and the kernel becomes weight-DMA / per-step-overhead bound (~3% MXU
    row utilization at 8 rows on v6e/v7x).  Batch tokens across requests/layers
    before calling if that matters -- there is no in-kernel fix.
    """
    w1, b1, w2, b2 = params["w1"], params["b1"], params["w2"], params["b2"]
    use_bf16 = params["use_bf16_matmul"]
    B, T, C = x.shape
    H = w1.shape[1]
    M = B * T
    out_dtype = x.dtype

    # Effective token tile: at most `tm`, at least 8 sublanes, never exceeding M
    # rounded up to a sublane multiple.  Grid covers M with zero padding.
    tm_eff = min(tm, max(8, -(-M // 8) * 8))
    grid_m = -(-M // tm_eff)          # cdiv
    M_pad = grid_m * tm_eff

    x2d = x.reshape(M, C)
    if M_pad != M:
        x2d = jnp.pad(x2d, ((0, M_pad - M), (0, 0)))
    if use_bf16:
        # Activations change every call, so this cast stays per-call (intentional
        # slight input-precision loss for c_fc; accumulation/bias/GELU are f32).
        x2d = x2d.astype(jnp.bfloat16)

    w_bytes = jnp.dtype(w1.dtype).itemsize
    x_bytes = jnp.dtype(x2d.dtype).itemsize
    out_bytes = jnp.dtype(out_dtype).itemsize
    vmem_limit = _vmem_limit_bytes()
    cost = _cost_estimate(M_pad, C, H, x_bytes, w_bytes, out_bytes)

    # VMEM fit estimate for the fully-resident path: weights (x1 or x2 depending on
    # buffering), double-buffered x/out stream tiles, and the (tm, H) f32 GELU temp
    # plus its cast copy and the f32 output temp.
    weight_copies = 1 if _single_buffered_weights_supported() else 2
    resident_est = (weight_copies * (2 * C * H * w_bytes + (H + C) * 4)
                    + 2 * tm_eff * C * (x_bytes + out_bytes)
                    + tm_eff * H * (4 + w_bytes) + tm_eff * C * 4)
    use_htiled = force_h_tiled or resident_est > 0.75 * vmem_limit

    if not use_htiled:
        call = _build_resident_call(grid_m, tm_eff, C, H, out_dtype, vmem_limit, cost)
    else:
        th = tile_h
        if th is None:
            th = next((c for c in (2048, 1024, 512, 256, 128) if H % c == 0), H)
        assert H % th == 0, f"tile_h={th} must divide H={H}"
        call = _build_htiled_call(grid_m, tm_eff, H // th, th, C, H,
                                  out_dtype, vmem_limit, cost)

    out2d = call(x2d, w1, b1, w2, b2)
    return out2d[:M].reshape(B, T, C)


# ----------------------------- reference -----------------------------

def mlp_reference(x2d, w1, b1, w2, b2):
    h = x2d @ w1 + b1
    h = 0.5 * h * (1.0 + jnp.tanh(_SQRT_2_OVER_PI * (h + 0.044715 * h ** 3)))
    return h @ w2 + b2


if __name__ == "__main__":
    # Small GPT-2-style config: n_embd=32 -> hidden = 4*32 = 128.  B=5 mirrors
    # max_return_sequences=5 from the original script; M=B*T=40 also exercises the
    # non-divisible-tile (padding) path.
    B, T, C = 5, 8, 32
    H = 4 * C

    key = jax.random.PRNGKey(0)
    kx, k1, k2, k3, k4 = jax.random.split(key, 5)

    x = jax.random.normal(kx, (B, T, C), dtype=jnp.float32)
    # PyTorch nn.Linear stores weight as (out, in); we initialize directly in
    # (in, out) layout (== weight.T) so matmuls are lane-dense.
    w1 = jax.random.normal(k1, (C, H), dtype=jnp.float32) * (1.0 / math.sqrt(C))
    b1 = jax.random.normal(k2, (H,), dtype=jnp.float32) * 0.02
    w2 = jax.random.normal(k3, (H, C), dtype=jnp.float32) * (1.0 / math.sqrt(H))
    b2 = jax.random.normal(k4, (C,), dtype=jnp.float32) * 0.02

    ref = mlp_reference(x.reshape(-1, C), w1, b1, w2, b2).reshape(B, T, C)

    # Parameters prepared ONCE and reused across calls (hoisted weight casts).
    params_f32 = prepare_mlp_params(w1, b1, w2, b2, use_bf16_matmul=False)
    params_bf16 = prepare_mlp_params(w1, b1, w2, b2, use_bf16_matmul=True)

    # 1) f32 matmul path (debug/tight-tolerance), default token tile.
    out_f32 = jax.block_until_ready(mlp_pallas(x, params_f32))
    assert out_f32.shape == (B, T, C)
    assert jnp.allclose(out_f32, ref, atol=1e-4, rtol=1e-4), "f32 mismatch vs reference"

    # 2) f32 path with a tile that does not divide M=40 (exercises the padding path).
    out_pad = jax.block_until_ready(mlp_pallas(x, params_f32, tm=16))
    assert jnp.allclose(out_pad, ref, atol=1e-4, rtol=1e-4), "padded-tile mismatch"

    # 3) bf16 matmul path (f32 accumulation) -- production default, looser tolerance.
    out_bf16 = jax.block_until_ready(mlp_pallas(x, params_bf16))
    assert jnp.allclose(out_bf16, ref, atol=1e-1, rtol=5e-2), "bf16 mismatch vs reference"

    # 4) H-tiled accumulation path (used automatically when resident weights exceed
    #    the VMEM budget, e.g. GPT-2 large/XL on v7x) -- forced here at a shape with
    #    two H steps so the pl.when init/finalize + scratch accumulation is exercised.
    C2, H2 = 128, 512
    kx2, k5, k6, k7, k8 = jax.random.split(jax.random.PRNGKey(1), 5)
    x2 = jax.random.normal(kx2, (2, 64, C2), dtype=jnp.float32)
    w1b = jax.random.normal(k5, (C2, H2), dtype=jnp.float32) * (1.0 / math.sqrt(C2))
    b1b = jax.random.normal(k6, (H2,), dtype=jnp.float32) * 0.02
    w2b = jax.random.normal(k7, (H2, C2), dtype=jnp.float32) * (1.0 / math.sqrt(H2))
    b2b = jax.random.normal(k8, (C2,), dtype=jnp.float32) * 0.02
    ref2 = mlp_reference(x2.reshape(-1, C2), w1b, b1b, w2b, b2b).reshape(2, 64, C2)
    params2 = prepare_mlp_params(w1b, b1b, w2b, b2b, use_bf16_matmul=False)
    out_ht = jax.block_until_ready(
        mlp_pallas(x2, params2, tile_h=256, force_h_tiled=True))
    assert jnp.allclose(out_ht, ref2, atol=1e-4, rtol=1e-4), "H-tiled mismatch"

    print("KERNEL_OK")
</pallas_src>

<mosaic_0001>
module attributes {stable_mosaic.version = 11 : i64} {
  func.func @_copy(%arg0: i32, %arg1: memref<8x128xf32, #tpu.memory_space<vmem>>, %arg2: memref<8x128xf32, #tpu.memory_space<vmem>>) attributes {dimension_semantics = [#tpu.dimension_semantics<arbitrary>], iteration_bounds = array<i64: 1>, scalar_prefetch = 0 : i64, scratch_operands = 0 : i64, tpu.core_type = #tpu.core_type<tc>, window_params = [{pipeline_mode = #tpu.pipeline_mode<synchronous>, transform_indices = @transform_0, window_bounds = array<i64: 8, 128>}, {pipeline_mode = #tpu.pipeline_mode<synchronous>, transform_indices = @transform_1, window_bounds = array<i64: 8, 128>}]} {
    %c0 = arith.constant 0 : index
    %c0_0 = arith.constant 0 : index
    %0 = vector.load %arg1[%c0, %c0_0] : memref<8x128xf32, #tpu.memory_space<vmem>>, vector<8x128xf32>
    %c0_1 = arith.constant 0 : index
    %c0_2 = arith.constant 0 : index
    %1 = vector.load %arg2[%c0_1, %c0_2] : memref<8x128xf32, #tpu.memory_space<vmem>>, vector<8x128xf32>
    tpu.vector_store %arg2[%c0_1, %c0_2], %0 {strides = array<i32>} : memref<8x128xf32, #tpu.memory_space<vmem>>, vector<8x128xf32>,
    return
  }
  func.func @transform_0(%arg0: i32) -> (i32, i32) {
    %c0_i32 = arith.constant 0 : i32
    %c0_i32_0 = arith.constant 0 : i32
    %c0_i32_1 = arith.constant 0 : i32
    return %c0_i32, %c0_i32_0 : i32, i32
  }
  func.func @transform_1(%arg0: i32) -> (i32, i32) {
    %c0_i32 = arith.constant 0 : i32
    %c0_i32_0 = arith.constant 0 : i32
    %c0_i32_1 = arith.constant 0 : i32
    return %c0_i32, %c0_i32_0 : i32, i32
  }
}

module attributes {stable_mosaic.version = 11 : i64} {
  func.func @_mlp_kernel_resident(%arg0: i32, %arg1: memref<40x32xf32, #tpu.memory_space<vmem>>, %arg2: memref<32x128xf32, #tpu.memory_space<vmem>>, %arg3: memref<1x128xf32, #tpu.memory_space<vmem>>, %arg4: memref<128x32xf32, #tpu.memory_space<vmem>>, %arg5: memref<1x32xf32, #tpu.memory_space<vmem>>, %arg6: memref<40x32xf32, #tpu.memory_space<vmem>>) attributes {dimension_semantics = [#tpu.dimension_semantics<parallel>], iteration_bounds = array<i64: 1>, scalar_prefetch = 0 : i64, scratch_operands = 0 : i64, tpu.core_type = #tpu.core_type<tc>, window_params = [{transform_indices = @transform_0, window_bounds = array<i64: 40, 32>}, {pipeline_mode = #tpu.pipeline_mode<synchronous>, transform_indices = @transform_1, window_bounds = array<i64: 32, 128>}, {pipeline_mode = #tpu.pipeline_mode<synchronous>, transform_indices = @transform_2, window_bounds = array<i64: 1, 128>}, {pipeline_mode = #tpu.pipeline_mode<synchronous>, transform_indices = @transform_3, window_bounds = array<i64: 128, 32>}, {pipeline_mode = #tpu.pipeline_mode<synchronous>, transform_indices = @transform_4, window_bounds = array<i64: 1, 32>}, {transform_indices = @transform_5, window_bounds = array<i64: 40, 32>}]} {
    %c0 = arith.constant 0 : index
    %c0_0 = arith.constant 0 : index
    %0 = vector.load %arg1[%c0, %c0_0] : memref<40x32xf32, #tpu.memory_space<vmem>>, vector<40x32xf32>
    %c0_1 = arith.constant 0 : index
    %c0_2 = arith.constant 0 : index
    %1 = vector.load %arg2[%c0_1, %c0_2] : memref<32x128xf32, #tpu.memory_space<vmem>>, vector<32x128xf32>
    %cst = arith.constant dense<0.000000e+00> : vector<40x128xf32>
    %2 = tpu.matmul %0, %1, %cst {dimension_numbers = #tpu.dot_dimension_numbers<[1], [0], [0], [1], [0, 0, 1, 1], [], []>} : vector<40x32xf32>, vector<32x128xf32>, vector<40x128xf32> -> vector<40x128xf32>
    %c0_3 = arith.constant 0 : index
    %c0_4 = arith.constant 0 : index
    %3 = vector.load %arg3[%c0_3, %c0_4] : memref<1x128xf32, #tpu.memory_space<vmem>>, vector<1x128xf32>
    %4 = vector.broadcast %3 : vector<1x128xf32> to vector<40x128xf32>
    %5 = arith.addf %2, %4 : vector<40x128xf32>
    %cst_5 = arith.constant 5.000000e-01 : f32
    %6 = vector.broadcast %cst_5 : f32 to vector<40x128xf32>
    %7 = arith.mulf %6, %5 : vector<40x128xf32>
    %8 = arith.mulf %5, %5 : vector<40x128xf32>
    %9 = arith.mulf %8, %5 : vector<40x128xf32>
    %cst_6 = arith.constant 4.471500e-02 : f32
    %10 = vector.broadcast %cst_6 : f32 to vector<40x128xf32>
    %11 = arith.mulf %10, %9 : vector<40x128xf32>
    %12 = arith.addf %5, %11 : vector<40x128xf32>
    %cst_7 = arith.constant 0.797884583 : f32
    %13 = vector.broadcast %cst_7 : f32 to vector<40x128xf32>
    %14 = arith.mulf %13, %12 : vector<40x128xf32>
    %15 = math.tanh %14 : vector<40x128xf32>
    %cst_8 = arith.constant 1.000000e+00 : f32
    %16 = vector.broadcast %cst_8 : f32 to vector<40x128xf32>
    %17 = arith.addf %16, %15 : vector<40x128xf32>
    %18 = arith.mulf %7, %17 : vector<40x128xf32>
    %c0_9 = arith.constant 0 : index
    %c0_10 = arith.constant 0 : index
    %19 = vector.load %arg4[%c0_9, %c0_10] : memref<128x32xf32, #tpu.memory_space<vmem>>, vector<128x32xf32>
    %cst_11 = arith.constant dense<0.000000e+00> : vector<40x32xf32>
    %20 = tpu.matmul %18, %19, %cst_11 {dimension_numbers = #tpu.dot_dimension_numbers<[1], [0], [0], [1], [0, 0, 1, 1], [], []>} : vector<40x128xf32>, vector<128x32xf32>, vector<40x32xf32> -> vector<40x32xf32>
    %c0_12 = arith.constant 0 : index
    %c0_13 = arith.constant 0 : index
    %21 = vector.load %arg5[%c0_12, %c0_13] : memref<1x32xf32, #tpu.memory_space<vmem>>, vector<1x32xf32>
    %22 = vector.broadcast %21 : vector<1x32xf32> to vector<40x32xf32>
    %23 = arith.addf %20, %22 : vector<40x32xf32>
    %c0_14 = arith.constant 0 : index
    %c0_15 = arith.constant 0 : index
    %24 = vector.load %arg6[%c0_14, %c0_15] : memref<40x32xf32, #tpu.memory_space<vmem>>, vector<40x32xf32>
    tpu.vector_store %arg6[%c0_14, %c0_15], %23 {strides = array<i32>} : memref<40x32xf32, #tpu.memory_space<vmem>>, vector<40x32xf32>,
    return
  }
  func.func @transform_0(%arg0: i32) -> (i32, i32) {
    %c0_i32 = arith.constant 0 : i32
    %c0_i32_0 = arith.constant 0 : i32
    return %arg0, %c0_i32 : i32, i32
  }
  func.func @transform_1(%arg0: i32) -> (i32, i32) {
    %c0_i32 = arith.constant 0 : i32
    %c0_i32_0 = arith.constant 0 : i32
    %c0_i32_1 = arith.constant 0 : i32
    return %c0_i32, %c0_i32_0 : i32, i32
  }
  func.func @transform_2(%arg0: i32) -> (i32, i32) {
    %c0_i32 = arith.constant 0 : i32
    %c0_i32_0 = arith.constant 0 : i32
    %c0_i32_1 = arith.constant 0 : i32
    return %c0_i32, %c0_i32_0 : i32, i32
  }
  func.func @transform_3(%arg0: i32) -> (i32, i32) {
    %c0_i32 = arith.constant 0 : i32
    %c0_i32_0 = arith.constant 0 : i32
    %c0_i32_1 = arith.constant 0 : i32
    return %c0_i32, %c0_i32_0 : i32, i32
  }
  func.func @transform_4(%arg0: i32) -> (i32, i32) {
    %c0_i32 = arith.constant 0 : i32
    %c0_i32_0 = arith.constant 0 : i32
    %c0_i32_1 = arith.constant 0 : i32
    return %c0_i32, %c0_i32_0 : i32, i32
  }
  func.func @transform_5(%arg0: i32) -> (i32, i32) {
    %c0_i32 = arith.constant 0 : i32
    %c0_i32_0 = arith.constant 0 : i32
    return %arg0, %c0_i32 : i32, i32
  }
}

</mosaic_0001>

<llo_original>
// kernel: tpu_custom_call.1
$region0: #{tpu_custom_call.1}
  #allocation0 [shape = 'u32[]', space=smem, size = 0x4, offset = 0x4, fixed_abs, tag = 'smem constant byte address 0x4 - core index']
  #allocation1 [shape = 'u32[144,128]{1,0:T(1,128)}', space=vmem, size = 0x12000, scoped, tag = 'internal scratch']
  %s0 = inlined_call_operand.hbm [shape: f32[8,128], index: 0, kind: input, shape index: {}]
  %s1 = inlined_call_operand.hbm [shape: f32[8,128], index: 1, kind: output, shape index: {}]
  %s2 = sld [smem:[#allocation0]]
  $region18: #{tpu_custom_call.1} parent=0
    _
  %s4 = ssub.s32 1, %s2
  %s5 = scalar_select 0, %s4, %s2
  $region1: #{tpu_custom_call.1} parent=0
    #allocation2 [shape = 'u8[4096]{0}', space=vmem, size = 0x1000, scoped, tag = 'input window, operand 0, single buffered']
    #allocation3 [shape = 's32[1]{0}', space=sflag, size = 0x4, scoped, tag = 'scoped memory for tpu_custom_call.1']
    #allocation4 [shape = 's32[1]{0}', space=sflag, size = 0x4, scoped, tag = 'scoped memory for tpu_custom_call.1']
    #allocation5 [shape = 'u8[4096]{0}', space=vmem, size = 0x1000, scoped, tag = 'output window, operand 0, single buffered']
    %6 = vsyncpa [#allocation3], 0
    %7 = vsyncpa [#allocation4], 0
    // Predicated region
    $region2: #{tpu_custom_call.1} parent=1 // pred_check
      _
    $region3: #{tpu_custom_call.1} parent=1 // pred_check_branch
      %9 = sbr.rel (0) target = $region5
    $region4: #{tpu_custom_call.1} parent=1 // pred_region
      %s11 = ssub.s32 128, 128
      %12 = vsyncadd [#allocation3], %s11
      %s14 = sshll.u32 [#allocation2], 4
      %s15 = int_to_ptr.vmem [resolvable:$true] %s14
      %17 = dma.hbm_to_vmem [thread:$0]  %s0, 128, %s15, [#allocation3]
    $region5: #{tpu_custom_call.1} parent=1 // pred_fallthru
      _
    // Predicated region
    $region6: #{tpu_custom_call.1} parent=1 // pred_check
      _
    $region7: #{tpu_custom_call.1} parent=1 // pred_check_branch
      %19 = sbr.rel (0) target = $region9
    $region8: #{tpu_custom_call.1} parent=1 // pred_region
      %20 = dma.done [#allocation3], 128
    $region9: #{tpu_custom_call.1} parent=1 // pred_fallthru
      _
    %v21 = vld [vmem:[#allocation2] sm:$0xff]
    %22 = vst [vmem:[#allocation5] sm:$0xff] %v21
    // Predicated region
    $region10: #{tpu_custom_call.1} parent=1 // pred_check
      _
    $region11: #{tpu_custom_call.1} parent=1 // pred_check_branch
      %24 = sbr.rel (0) target = $region13
    $region12: #{tpu_custom_call.1} parent=1 // pred_region
      %s26 = ssub.s32 128, 128
      %27 = vsyncadd [#allocation4], %s26
      %s29 = sshll.u32 [#allocation5], 4
      %s30 = int_to_ptr.vmem [resolvable:$true] %s29
      %32 = dma.vmem_to_hbm [thread:$0]  %s30, 128, %s1, [#allocation4]
    $region13: #{tpu_custom_call.1} parent=1 // pred_fallthru
      _
    // Predicated region
    $region14: #{tpu_custom_call.1} parent=1 // pred_check
      _
    $region15: #{tpu_custom_call.1} parent=1 // pred_check_branch
      %34 = sbr.rel (0) target = $region17
    $region16: #{tpu_custom_call.1} parent=1 // pred_region
      %35 = dma.done [#allocation4], 128
    $region17: #{tpu_custom_call.1} parent=1 // pred_fallthru
      _
    %36 = vsyncpa [#allocation3], 1
    %37 = vsyncpa [#allocation4], 1

// kernel: tpu_custom_call.1
$region0: #{tpu_custom_call.1}
  #allocation0 [shape = 'u32[]', space=smem, size = 0x4, offset = 0x4, fixed_abs, tag = 'smem constant byte address 0x4 - core index']
  #allocation1 [shape = 'u32[144,128]{1,0:T(1,128)}', space=vmem, size = 0x12000, scoped, tag = 'internal scratch']
  %s0 = inlined_call_operand.vmem [shape: f32[40,32], index: 0, kind: input, shape index: {}]
  %s1 = inlined_call_operand.vmem [shape: f32[32,128], index: 1, kind: input, shape index: {}]
  %s2 = inlined_call_operand.vmem [shape: f32[1,128], index: 2, kind: input, shape index: {}]
  %s3 = inlined_call_operand.vmem [shape: f32[128,32], index: 3, kind: input, shape index: {}]
  %s4 = inlined_call_operand.vmem [shape: f32[1,32], index: 4, kind: input, shape index: {}]
  %s5 = inlined_call_operand.vmem [shape: f32[40,32], index: 5, kind: output, shape index: {}]
  %s6 = sld [smem:[#allocation0]]
  $region30: #{tpu_custom_call.1} parent=0
    _
  %s8 = ssub.s32 1, %s6
  %s9 = scalar_select 0, %s8, %s6
  // Predicated region
  $region2: #{tpu_custom_call.1} parent=0 // pred_check
    _
  $region3: #{tpu_custom_call.1} parent=0 // pred_check_branch
    %11 = sbr.rel (0) target = $region5
  $region4: #{tpu_custom_call.1} parent=0 // pred_region
    _
  $region5: #{tpu_custom_call.1} parent=0 // pred_fallthru
    _
  // Predicated region
  $region6: #{tpu_custom_call.1} parent=0 // pred_check
    _
  $region7: #{tpu_custom_call.1} parent=0 // pred_check_branch
    %13 = sbr.rel (0) target = $region9
  $region8: #{tpu_custom_call.1} parent=0 // pred_region
    _
  $region9: #{tpu_custom_call.1} parent=0 // pred_fallthru
    _
  // Predicated region
  $region10: #{tpu_custom_call.1} parent=0 // pred_check
    _
  $region11: #{tpu_custom_call.1} parent=0 // pred_check_branch
    %15 = sbr.rel (0) target = $region13
  $region12: #{tpu_custom_call.1} parent=0 // pred_region
    _
  $region13: #{tpu_custom_call.1} parent=0 // pred_fallthru
    _
  // Predicated region
  $region14: #{tpu_custom_call.1} parent=0 // pred_check
    _
  $region15: #{tpu_custom_call.1} parent=0 // pred_check_branch
    %17 = sbr.rel (0) target = $region17
  $region16: #{tpu_custom_call.1} parent=0 // pred_region
    _
  $region17: #{tpu_custom_call.1} parent=0 // pred_fallthru
    _
  // Predicated region
  $region18: #{tpu_custom_call.1} parent=0 // pred_check
    _
  $region19: #{tpu_custom_call.1} parent=0 // pred_check_branch
    %19 = sbr.rel (0) target = $region21
  $region20: #{tpu_custom_call.1} parent=0 // pred_region
    _
  $region21: #{tpu_custom_call.1} parent=0 // pred_fallthru
    _
  %v20 = vld [vmem:[%s0] sm:$0xff]
  %v21 = vld [vmem:[%s0 + $0x8] sm:$0xff]
  %v22 = vld [vmem:[%s0 + $0x10] sm:$0xff]
  %v23 = vld [vmem:[%s0 + $0x18] sm:$0xff]
  %v24 = vld [vmem:[%s0 + $0x20] sm:$0xff]
  %v25 = vld [vmem:[%s1] sm:$0xff]
  %v26 = vld [vmem:[%s1 + $0x8] sm:$0xff]
  %v27 = vld [vmem:[%s1 + $0x10] sm:$0xff]
  %v28 = vld [vmem:[%s1 + $0x18] sm:$0xff]
  %v29 = vld [vmem:[%s2] sm:$0x1]
  %v31 = vlaneseq
  %v32 = vshrl.u32 %v31, 7
  %v33 = vsub.s32 0, %v32
  %v34 = vrot.slane %v29, %v33
  %vm36 = vcmask 261120
  %v38 = vsel %vm36, %v20, 0
  %v41 = vsel %vm36, %v21, 0
  %v44 = vsel %vm36, %v22, 0
  %v47 = vsel %vm36, %v23, 0
  %v50 = vsel %vm36, %v24, 0
  %52 = vmatprep.subr.mxu0 0.0
  %53 = vmatpush1.msra.mxu0 %v25
  %54 = vmatprep.subr.mxu0 0.0
  %55 = vmatpush1.msra.mxu0 %v26
  %56 = vmatprep.subr.mxu0 0.0
  %57 = vmatpush1.msra.mxu0 %v27
  %58 = vmatprep.subr.mxu0 0.0
  %59 = vmatpush1.msra.mxu0 %v28
  %60 = vmatprep.subr.mxu0 0.0
  %61 = vmatpush1.msra.mxu0 0.0
  %62 = vmatprep.subr.mxu0 0.0
  %63 = vmatpush1.msra.mxu0 0.0
  %64 = vmatprep.subr.mxu0 0.0
  %65 = vmatpush1.msra.mxu0 0.0
  %66 = vmatprep.subr.mxu0 0.0
  %67 = vmatpush1.msra.mxu0 0.0
  %68 = vmatprep.subr.mxu0 0.0
  %69 = vmatpush1.msra.mxu0 0.0
  %70 = vmatprep.subr.mxu0 0.0
  %71 = vmatpush1.msra.mxu0 0.0
  %72 = vmatprep.subr.mxu0 0.0
  %73 = vmatpush1.msra.mxu0 0.0
  %74 = vmatprep.subr.mxu0 0.0
  %75 = vmatpush1.msra.mxu0 0.0
  %76 = vmatprep.subr.mxu0 0.0
  %77 = vmatpush1.msra.mxu0 0.0
  %78 = vmatprep.subr.mxu0 0.0
  %79 = vmatpush1.msra.mxu0 0.0
  %80 = vmatprep.subr.mxu0 0.0
  %81 = vmatpush1.msra.mxu0 0.0
  %82 = vmatprep.subr.mxu0 0.0
  %83 = vmatpush1.msra.mxu0 0.0
  %84 = vmatprep.subr.mxu0 0.0
  %85 = vmatpush1.msra.mxu0 0.0
  %86 = vmatprep.subr.mxu0 0.0
  %87 = vmatpush1.msra.mxu0 0.0
  %88 = vmatprep.subr.mxu0 0.0
  %89 = vmatpush1.msra.mxu0 0.0
  %90 = vmatprep.subr.mxu0 0.0
  %91 = vmatpush1.msra.mxu0 0.0
  %92 = vmatprep.subr.mxu0 0.0
  %93 = vmatpush1.msra.mxu0 0.0
  %94 = vmatprep.subr.mxu0 0.0
  %95 = vmatpush1.msra.mxu0 0.0
  %96 = vmatprep.subr.mxu0 0.0
  %97 = vmatpush1.msra.mxu0 0.0
  %98 = vmatprep.subr.mxu0 0.0
  %99 = vmatpush1.msra.mxu0 0.0
  %100 = vmatprep.subr.mxu0 0.0
  %101 = vmatpush1.msra.mxu0 0.0
  %102 = vmatprep.subr.mxu0 0.0
  %103 = vmatpush1.msra.mxu0 0.0
  %104 = vmatprep.subr.mxu0 0.0
  %105 = vmatpush1.msra.mxu0 0.0
  %106 = vmatprep.subr.mxu0 0.0
  %107 = vmatpush1.msra.mxu0 0.0
  %108 = vmatprep.subr.mxu0 0.0
  %109 = vmatpush1.msra.mxu0 0.0
  %110 = vmatprep.subr.mxu0 0.0
  %111 = vmatpush1.msra.mxu0 0.0
  %112 = vmatprep.subr.mxu0 0.0
  %113 = vmatpush1.msra.mxu0 0.0
  %114 = vmatprep.subr.mxu0 0.0
  %115 = vmatpush1.msra.mxu0 0.0
  %116 = vmatprep.mubr.f32.mxu0 0.0
  %117 = vmatmul.mubr.f32.gmra.mrb[0].mxu0 %v38
  %v118 = vpop.f32.mrb[0].mxu0
  %v119 = vadd.f32 %v34, %v118
  %v120 = vpop.f32.mrb[0].mxu0
  %121 = vmatprep.mubr.f32.mxu0 0.0
  %122 = vmatmul.mubr.f32.gmra.mrb[0].mxu0 %v41
  %v123 = vpop.f32.mrb[0].mxu0
  %v124 = vadd.f32 %v34, %v123
  %v125 = vpop.f32.mrb[0].mxu0
  %126 = vmatprep.mubr.f32.mxu0 0.0
  %127 = vmatmul.mubr.f32.gmra.mrb[0].mxu0 %v44
  %v128 = vpop.f32.mrb[0].mxu0
  %v129 = vadd.f32 %v34, %v128
  %v130 = vpop.f32.mrb[0].mxu0
  %131 = vmatprep.mubr.f32.mxu0 0.0
  %132 = vmatmul.mubr.f32.gmra.mrb[0].mxu0 %v47
  %v133 = vpop.f32.mrb[0].mxu0
  %v134 = vadd.f32 %v34, %v133
  %v135 = vpop.f32.mrb[0].mxu0
  %136 = vmatprep.mubr.f32.mxu0 0.0
  %137 = vmatmul.mubr.f32.gmra.mrb[0].mxu0 %v50
  %v138 = vpop.f32.mrb[0].mxu0
  %v139 = vadd.f32 %v34, %v138
  %v140 = vpop.f32.mrb[0].mxu0
  %141 = vdwg.mxu0
  %v142 = vmul.f32 %v119, 0.5
  %v143 = vmul.f32 %v124, 0.5
  %v144 = vmul.f32 %v129, 0.5
  %v145 = vmul.f32 %v134, 0.5
  %v146 = vmul.f32 %v139, 0.5
  %v147 = vmul.f32 %v119, %v119
  %v148 = vmul.f32 %v124, %v124
  %v149 = vmul.f32 %v129, %v129
  %v150 = vmul.f32 %v134, %v134
  %v151 = vmul.f32 %v139, %v139
  %v152 = vmul.f32 %v147, %v119
  %v153 = vmul.f32 %v148, %v124
  %v154 = vmul.f32 %v149, %v129
  %v155 = vmul.f32 %v150, %v134
  %v156 = vmul.f32 %v151, %v139
  %v157 = vmul.f32 %v152, 0.044715
  %v158 = vmul.f32 %v153, 0.044715
  %v159 = vmul.f32 %v154, 0.044715
  %v160 = vmul.f32 %v155, 0.044715
  %v161 = vmul.f32 %v156, 0.044715
  %v162 = vadd.f32 %v119, %v157
  %v163 = vadd.f32 %v124, %v158
  %v164 = vadd.f32 %v129, %v159
  %v165 = vadd.f32 %v134, %v160
  %v166 = vadd.f32 %v139, %v161
  %v167 = vmul.f32 %v162, 0.7978846
  %v168 = vmul.f32 %v163, 0.7978846
  %v169 = vmul.f32 %v164, 0.7978846
  %v170 = vmul.f32 %v165, 0.7978846
  %v171 = vmul.f32 %v166, 0.7978846
  %v172 = vtanh.pop %v167
  %v173 = vtanh.pop %v168
  %v174 = vtanh.pop %v169
  %v175 = vtanh.pop %v170
  %v176 = vtanh.pop %v171
  %v177 = vadd.f32 %v172, 1.0
  %v178 = vadd.f32 %v173, 1.0
  %v179 = vadd.f32 %v174, 1.0
  %v180 = vadd.f32 %v175, 1.0
  %v181 = vadd.f32 %v176, 1.0
  %v182 = vmul.f32 %v142, %v177
  %v183 = vmul.f32 %v143, %v178
  %v184 = vmul.f32 %v144, %v179
  %v185 = vmul.f32 %v145, %v180
  %v186 = vmul.f32 %v146, %v181
  %v187 = vld [vmem:[%s3] sm:$0xff]
  %v188 = vld [vmem:[%s3 + $0x8] sm:$0xff]
  %v189 = vld [vmem:[%s3 + $0x10] sm:$0xff]
  %v190 = vld [vmem:[%s3 + $0x18] sm:$0xff]
  %v191 = vld [vmem:[%s3 + $0x20] sm:$0xff]
  %v192 = vld [vmem:[%s3 + $0x28] sm:$0xff]
  %v193 = vld [vmem:[%s3 + $0x30] sm:$0xff]
  %v194 = vld [vmem:[%s3 + $0x38] sm:$0xff]
  %v195 = vld [vmem:[%s3 + $0x40] sm:$0xff]
  %v196 = vld [vmem:[%s3 + $0x48] sm:$0xff]
  %v197 = vld [vmem:[%s3 + $0x50] sm:$0xff]
  %v198 = vld [vmem:[%s3 + $0x58] sm:$0xff]
  %v199 = vld [vmem:[%s3 + $0x60] sm:$0xff]
  %v200 = vld [vmem:[%s3 + $0x68] sm:$0xff]
  %v201 = vld [vmem:[%s3 + $0x70] sm:$0xff]
  %v202 = vld [vmem:[%s3 + $0x78] sm:$0xff]
  %v203 = vld [vmem:[%s4] sm:$0x1]
  %v205 = vlaneseq
  %v206 = vshrl.u32 %v205, 7
  %v207 = vsub.s32 0, %v206
  %v208 = vrot.slane %v203, %v207
  %210 = vmatprep.subr.mxu0 0.0
  %211 = vmatpush1.msra.mxu0 %v187
  %212 = vmatprep.subr.mxu0 0.0
  %213 = vmatpush1.msra.mxu0 %v188
  %214 = vmatprep.subr.mxu0 0.0
  %215 = vmatpush1.msra.mxu0 %v189
  %216 = vmatprep.subr.mxu0 0.0
  %217 = vmatpush1.msra.mxu0 %v190
  %218 = vmatprep.subr.mxu0 0.0
  %219 = vmatpush1.msra.mxu0 %v191
  %220 = vmatprep.subr.mxu0 0.0
  %221 = vmatpush1.msra.mxu0 %v192
  %222 = vmatprep.subr.mxu0 0.0
  %223 = vmatpush1.msra.mxu0 %v193
  %224 = vmatprep.subr.mxu0 0.0
  %225 = vmatpush1.msra.mxu0 %v194
  %226 = vmatprep.subr.mxu0 0.0
  %227 = vmatpush1.msra.mxu0 %v195
  %228 = vmatprep.subr.mxu0 0.0
  %229 = vmatpush1.msra.mxu0 %v196
  %230 = vmatprep.subr.mxu0 0.0
  %231 = vmatpush1.msra.mxu0 %v197
  %232 = vmatprep.subr.mxu0 0.0
  %233 = vmatpush1.msra.mxu0 %v198
  %234 = vmatprep.subr.mxu0 0.0
  %235 = vmatpush1.msra.mxu0 %v199
  %236 = vmatprep.subr.mxu0 0.0
  %237 = vmatpush1.msra.mxu0 %v200
  %238 = vmatprep.subr.mxu0 0.0
  %239 = vmatpush1.msra.mxu0 %v201
  %240 = vmatprep.subr.mxu0 0.0
  %241 = vmatpush1.msra.mxu0 %v202
  %242 = vmatprep.subr.mxu0 0.0
  %243 = vmatpush1.msra.mxu0 0.0
  %244 = vmatprep.subr.mxu0 0.0
  %245 = vmatpush1.msra.mxu0 0.0
  %246 = vmatprep.subr.mxu0 0.0
  %247 = vmatpush1.msra.mxu0 0.0
  %248 = vmatprep.subr.mxu0 0.0
  %249 = vmatpush1.msra.mxu0 0.0
  %250 = vmatprep.subr.mxu0 0.0
  %251 = vmatpush1.msra.mxu0 0.0
  %252 = vmatprep.subr.mxu0 0.0
  %253 = vmatpush1.msra.mxu0 0.0
  %254 = vmatprep.subr.mxu0 0.0
  %255 = vmatpush1.msra.mxu0 0.0
  %256 = vmatprep.subr.mxu0 0.0
  %257 = vmatpush1.msra.mxu0 0.0
  %258 = vmatprep.subr.mxu0 0.0
  %259 = vmatpush1.msra.mxu0 0.0
  %260 = vmatprep.subr.mxu0 0.0
  %261 = vmatpush1.msra.mxu0 0.0
  %262 = vmatprep.subr.mxu0 0.0
  %263 = vmatpush1.msra.mxu0 0.0
  %264 = vmatprep.subr.mxu0 0.0
  %265 = vmatpush1.msra.mxu0 0.0
  %266 = vmatprep.subr.mxu0 0.0
  %267 = vmatpush1.msra.mxu0 0.0
  %268 = vmatprep.subr.mxu0 0.0
  %269 = vmatpush1.msra.mxu0 0.0
  %270 = vmatprep.subr.mxu0 0.0
  %271 = vmatpush1.msra.mxu0 0.0
  %272 = vmatprep.subr.mxu0 0.0
  %273 = vmatpush1.msra.mxu0 0.0
  %274 = vmatprep.mubr.f32.mxu0 0.0
  %275 = vmatmul.mubr.f32.gmra.mrb[0].mxu0 %v182
  %v276 = vpop.f32.mrb[0].mxu0
  %v277 = vadd.f32 %v208, %v276
  %v278 = vpop.f32.mrb[0].mxu0
  %279 = vmatprep.mubr.f32.mxu0 0.0
  %280 = vmatmul.mubr.f32.gmra.mrb[0].mxu0 %v183
  %v281 = vpop.f32.mrb[0].mxu0
  %v282 = vadd.f32 %v208, %v281
  %v283 = vpop.f32.mrb[0].mxu0
  %284 = vmatprep.mubr.f32.mxu0 0.0
  %285 = vmatmul.mubr.f32.gmra.mrb[0].mxu0 %v184
  %v286 = vpop.f32.mrb[0].mxu0
  %v287 = vadd.f32 %v208, %v286
  %v288 = vpop.f32.mrb[0].mxu0
  %289 = vmatprep.mubr.f32.mxu0 0.0
  %290 = vmatmul.mubr.f32.gmra.mrb[0].mxu0 %v185
  %v291 = vpop.f32.mrb[0].mxu0
  %v292 = vadd.f32 %v208, %v291
  %v293 = vpop.f32.mrb[0].mxu0
  %294 = vmatprep.mubr.f32.mxu0 0.0
  %295 = vmatmul.mubr.f32.gmra.mrb[0].mxu0 %v186
  %v296 = vpop.f32.mrb[0].mxu0
  %v297 = vadd.f32 %v208, %v296
  %v298 = vpop.f32.mrb[0].mxu0
  %299 = vdwg.mxu0
  %300 = vst.msk [vmem:[%s5] sm:$0xff] %vm36, %v277
  %301 = vst.msk [vmem:[%s5 + $0x8] sm:$0xff] %vm36, %v282
  %302 = vst.msk [vmem:[%s5 + $0x10] sm:$0xff] %vm36, %v287
  %303 = vst.msk [vmem:[%s5 + $0x18] sm:$0xff] %vm36, %v292
  %304 = vst.msk [vmem:[%s5 + $0x20] sm:$0xff] %vm36, %v297
  // Predicated region
  $region22: #{tpu_custom_call.1} parent=0 // pred_check
    _
  $region23: #{tpu_custom_call.1} parent=0 // pred_check_branch
    %306 = sbr.rel (0) target = $region25
  $region24: #{tpu_custom_call.1} parent=0 // pred_region
    _
  $region25: #{tpu_custom_call.1} parent=0 // pred_fallthru
    _
  // Predicated region
  $region26: #{tpu_custom_call.1} parent=0 // pred_check
    _
  $region27: #{tpu_custom_call.1} parent=0 // pred_check_branch
    %308 = sbr.rel (0) target = $region29
  $region28: #{tpu_custom_call.1} parent=0 // pred_region
    _
  $region29: #{tpu_custom_call.1} parent=0 // pred_fallthru
    _

</llo_original>
